<compile_context>
chip_gen: v5e
topology: v5e:2x2
jax: 0.10.0
libtpu: 0.0.40
codegen_flags: <defaults>
</compile_context>

<pallas_src>
import math
import jax
import jax.numpy as jnp
from jax.experimental import pallas as pl
from jax.experimental.pallas import tpu as pltpu

_INV_SQRT2 = 1.0 / math.sqrt(2.0)


# ----------------------------------------------------------------------------
# Kernels
# ----------------------------------------------------------------------------
def mlp_resident_kernel(x_ref, wfc_ref, bfc_ref, wproj_ref, bproj_ref, o_ref):
    """Weights fully VMEM-resident: single pass, no accumulator scratch."""
    # x_ref: (tm, D), wfc_ref: (D, H), bfc_ref: (1, H),
    # wproj_ref: (H, D), bproj_ref: (1, D), o_ref: (tm, D)
    h = jnp.dot(x_ref[...], wfc_ref[...], preferred_element_type=jnp.float32)
    h = h + bfc_ref[...].astype(jnp.float32)
    # exact GELU (erf form), matching torch.nn.GELU() default, in f32
    h = 0.5 * h * (1.0 + jax.lax.erf(h * _INV_SQRT2))
    y = jnp.dot(h.astype(wproj_ref.dtype), wproj_ref[...],
                preferred_element_type=jnp.float32)
    y = y + bproj_ref[...].astype(jnp.float32)
    # dropout with p=0 / eval mode == identity
    o_ref[...] = y.astype(o_ref.dtype)


def mlp_streamed_kernel(x_ref, wfc_ref, bfc_ref, wproj_ref, bproj_ref, o_ref,
                        acc_ref):
    """Hidden dim streamed in th-sized chunks with an f32 VMEM accumulator."""
    # x_ref: (tm, D), wfc_ref: (D, th), bfc_ref: (1, th),
    # wproj_ref: (th, D), bproj_ref: (1, D), acc_ref: (tm, D) f32 scratch
    h_idx = pl.program_id(1)
    last = pl.num_programs(1) - 1

    h = jnp.dot(x_ref[...], wfc_ref[...], preferred_element_type=jnp.float32)
    h = h + bfc_ref[...].astype(jnp.float32)
    h = 0.5 * h * (1.0 + jax.lax.erf(h * _INV_SQRT2))
    partial = jnp.dot(h.astype(wproj_ref.dtype), wproj_ref[...],
                      preferred_element_type=jnp.float32)

    @pl.when(h_idx == 0)
    def _():
        # Write directly: saves a full (tm, D) f32 zero + read/modify/write pass.
        acc_ref[...] = partial

    @pl.when(h_idx > 0)
    def _():
        acc_ref[...] += partial

    @pl.when(h_idx == last)
    def _():
        y = acc_ref[...] + bproj_ref[...].astype(jnp.float32)
        o_ref[...] = y.astype(o_ref.dtype)


# ----------------------------------------------------------------------------
# Tiling / VMEM heuristics
# ----------------------------------------------------------------------------
def _round_up(x, m):
    return -(-x // m) * m


def _physical_vmem_bytes():
    try:
        return int(pltpu.get_tpu_info().vmem_capacity_bytes)
    except Exception:
        return 64 << 20  # conservative fallback = v7x per-TC VMEM


def _footprint_bytes(tm, th, D, xb, wb, ob):
    """Estimated VMEM working set for one grid step (double-buffered blocks)."""
    x_blk = 2 * tm * D * xb
    wfc_blk = 2 * D * th * wb
    bfc_blk = 2 * th * wb
    wpj_blk = 2 * th * D * wb
    bpj_blk = 2 * D * wb
    out_blk = 2 * tm * D * ob
    acc = tm * D * 4                       # f32 accumulator scratch
    inter = tm * th * (4 + max(wb, 2))     # f32 GELU intermediate + cast copy
    return x_blk + wfc_blk + bfc_blk + wpj_blk + bpj_blk + out_blk + acc + inter


def _choose_tiles(M, D, H, xb, wb, ob, budget):
    m8 = _round_up(M, 8)
    tm_cap = min(512, m8)
    if m8 > 8:
        # Keep at least 2 M blocks so the 'parallel' axis can span both
        # TensorCores on v7x (shrink tm for small / decode shapes).
        tm_cap = min(tm_cap, _round_up(-(-m8 // 2), 8))
    tm_cap = max(tm_cap, 8)
    std = (512, 384, 256, 192, 128, 96, 64, 32, 16, 8)
    tm_cands = [tm_cap] + [t for t in std if t < tm_cap]

    th_cands = [H]
    if H % 128 == 0:
        for c in (1024, 512, 256, 128):
            if c < H and H % c == 0:
                th_cands.append(c)

    # Pass 1: weights fully VMEM-resident (read from HBM exactly once).
    for tm in tm_cands:
        if _footprint_bytes(tm, H, D, xb, wb, ob) <= budget:
            return tm, H
    # Pass 2: stream the hidden dim; prefer large tm, then large th.
    for tm in tm_cands:
        for th in th_cands[1:]:
            if _footprint_bytes(tm, th, D, xb, wb, ob) <= budget:
                return tm, th
    # Fallback: smallest tiles (may still need a raised vmem limit).
    return tm_cands[-1], th_cands[-1]


# ----------------------------------------------------------------------------
# Wrapper
# ----------------------------------------------------------------------------
def mlp_layer(x, w_fc, b_fc, w_proj, b_proj, *, tm=None, th=None,
              vmem_budget_bytes=None):
    """x: (B, T, n_embd). w_fc: (n_embd, 4*n_embd), w_proj: (4*n_embd, n_embd).

    Weights/activations may be f32 (exact parity) or bf16 (fast MXU path);
    accumulation is always f32.
    """
    B, T, D = x.shape
    H = w_fc.shape[1]
    M = B * T
    xb = jnp.dtype(x.dtype).itemsize
    wb = jnp.dtype(w_fc.dtype).itemsize
    ob = xb

    phys_vmem = _physical_vmem_bytes()
    if vmem_budget_bytes is None:
        vmem_budget_bytes = int(phys_vmem * 0.75)

    auto_tm, auto_th = _choose_tiles(M, D, H, xb, wb, ob, vmem_budget_bytes)
    if tm is None:
        tm = auto_tm
    tm = max(8, _round_up(min(tm, _round_up(M, 8)), 8))
    if th is None:
        th = auto_th
    if th != H and (H % th != 0 or th % 128 != 0):
        th = H  # th must divide H and be lane-aligned, else keep H whole

    m_pad = _round_up(M, tm)
    x2 = x.reshape(M, D)
    if m_pad != M:
        x2 = jnp.pad(x2, ((0, m_pad - M), (0, 0)))

    b_fc2 = b_fc.reshape(1, H)
    b_proj2 = b_proj.reshape(1, D)

    n_m = m_pad // tm
    n_h = H // th

    needed = _footprint_bytes(tm, th, D, xb, wb, ob)
    vmem_limit = int(min(max(needed * 1.25 + (4 << 20), 32 << 20),
                         phys_vmem * 0.9))

    # Advisory cost model for XLA's scheduler around the custom call.
    w_hbm_bytes = (2 * D * H + H + D) * wb
    bytes_accessed = m_pad * D * (xb + ob) + (
        w_hbm_bytes if n_h == 1 else n_m * w_hbm_bytes)
    cost = pl.CostEstimate(flops=4 * m_pad * D * H,
                           transcendentals=m_pad * H,
                           bytes_accessed=int(bytes_accessed))

    if n_h == 1:
        # Weight-resident fast path: constant weight index maps -> weights are
        # DMA'd to VMEM once for the whole kernel; no accumulator scratch.
        out2 = pl.pallas_call(
            mlp_resident_kernel,
            out_shape=jax.ShapeDtypeStruct((m_pad, D), x.dtype),
            grid_spec=pltpu.PrefetchScalarGridSpec(
                num_scalar_prefetch=0,
                grid=(n_m,),
                in_specs=[
                    pl.BlockSpec((tm, D), lambda i: (i, 0)),   # x tile
                    pl.BlockSpec((D, H), lambda i: (0, 0)),    # W_fc (resident)
                    pl.BlockSpec((1, H), lambda i: (0, 0)),    # b_fc
                    pl.BlockSpec((H, D), lambda i: (0, 0)),    # W_proj (resident)
                    pl.BlockSpec((1, D), lambda i: (0, 0)),    # b_proj
                ],
                out_specs=pl.BlockSpec((tm, D), lambda i: (i, 0)),
            ),
            compiler_params=pltpu.CompilerParams(
                dimension_semantics=("parallel",),
                vmem_limit_bytes=vmem_limit),
            cost_estimate=cost,
        )(x2, w_fc, b_fc2, w_proj, b_proj2)
    else:
        out2 = pl.pallas_call(
            mlp_streamed_kernel,
            out_shape=jax.ShapeDtypeStruct((m_pad, D), x.dtype),
            grid_spec=pltpu.PrefetchScalarGridSpec(
                num_scalar_prefetch=0,
                grid=(n_m, n_h),
                in_specs=[
                    pl.BlockSpec((tm, D), lambda i, h: (i, 0)),  # x tile
                    pl.BlockSpec((D, th), lambda i, h: (0, h)),  # W_fc chunk
                    pl.BlockSpec((1, th), lambda i, h: (0, h)),  # b_fc chunk
                    pl.BlockSpec((th, D), lambda i, h: (h, 0)),  # W_proj chunk
                    pl.BlockSpec((1, D), lambda i, h: (0, 0)),   # b_proj
                ],
                out_specs=pl.BlockSpec((tm, D), lambda i, h: (i, 0)),
                scratch_shapes=[pltpu.VMEM((tm, D), jnp.float32)],
            ),
            compiler_params=pltpu.CompilerParams(
                dimension_semantics=("parallel", "arbitrary"),
                vmem_limit_bytes=vmem_limit),
            cost_estimate=cost,
        )(x2, w_fc, b_fc2, w_proj, b_proj2)

    return out2[:M].reshape(B, T, D)


def reference_mlp(x, w_fc, b_fc, w_proj, b_proj):
    h = x @ w_fc + b_fc
    h = 0.5 * h * (1.0 + jax.lax.erf(h * _INV_SQRT2))
    return h @ w_proj + b_proj


if __name__ == "__main__":
    key = jax.random.PRNGKey(0)

    # --- Test 1 (module config): n_embd=32, bias=True, dropout=0.0 ---------
    # Tiny D=32 is a functional check only (lane-dim 32 output is a masked-store
    # toy shape); real sizing decisions target D>=768.
    B, T, n_embd = 2, 8, 32
    hidden = 4 * n_embd
    kx, k1, k2, k3, k4, key = jax.random.split(key, 6)
    x = jax.random.normal(kx, (B, T, n_embd), dtype=jnp.float32)
    w_fc = jax.random.normal(k1, (n_embd, hidden), dtype=jnp.float32) / math.sqrt(n_embd)
    b_fc = jax.random.normal(k2, (hidden,), dtype=jnp.float32) * 0.01
    w_proj = jax.random.normal(k3, (hidden, n_embd), dtype=jnp.float32) / math.sqrt(hidden)
    b_proj = jax.random.normal(k4, (n_embd,), dtype=jnp.float32) * 0.01

    out = jax.block_until_ready(mlp_layer(x, w_fc, b_fc, w_proj, b_proj))
    ref = reference_mlp(x, w_fc, b_fc, w_proj, b_proj)
    assert out.shape == (B, T, n_embd)
    assert jnp.allclose(out, ref, atol=1e-4, rtol=1e-4), "resident path mismatch"

    # --- Test 2: exercise the streamed (H-chunked accumulator) path ---------
    B2, T2, D2 = 2, 24, 64
    H2 = 4 * D2
    kx, k1, k2, k3, k4, key = jax.random.split(key, 6)
    x_s = jax.random.normal(kx, (B2, T2, D2), dtype=jnp.float32)
    w_fc_s = jax.random.normal(k1, (D2, H2), dtype=jnp.float32) / math.sqrt(D2)
    b_fc_s = jax.random.normal(k2, (H2,), dtype=jnp.float32) * 0.01
    w_proj_s = jax.random.normal(k3, (H2, D2), dtype=jnp.float32) / math.sqrt(H2)
    b_proj_s = jax.random.normal(k4, (D2,), dtype=jnp.float32) * 0.01

    out_s = jax.block_until_ready(
        mlp_layer(x_s, w_fc_s, b_fc_s, w_proj_s, b_proj_s, th=128))
    ref_s = reference_mlp(x_s, w_fc_s, b_fc_s, w_proj_s, b_proj_s)
    assert jnp.allclose(out_s, ref_s, atol=1e-4, rtol=1e-4), "streamed path mismatch"

    print("KERNEL_OK")
</pallas_src>

<mosaic_0001>
module attributes {stable_mosaic.version = 11 : i64} {
  func.func @mlp_resident_kernel(%arg0: i32, %arg1: memref<8x32xf32, #tpu.memory_space<vmem>>, %arg2: memref<32x128xf32, #tpu.memory_space<vmem>>, %arg3: memref<1x128xf32, #tpu.memory_space<vmem>>, %arg4: memref<128x32xf32, #tpu.memory_space<vmem>>, %arg5: memref<1x32xf32, #tpu.memory_space<vmem>>, %arg6: memref<8x32xf32, #tpu.memory_space<vmem>>) attributes {dimension_semantics = [#tpu.dimension_semantics<parallel>], iteration_bounds = array<i64: 2>, scalar_prefetch = 0 : i64, scratch_operands = 0 : i64, tpu.core_type = #tpu.core_type<tc>, window_params = [{transform_indices = @transform_0, window_bounds = array<i64: 8, 32>}, {pipeline_mode = #tpu.pipeline_mode<synchronous>, transform_indices = @transform_1, window_bounds = array<i64: 32, 128>}, {pipeline_mode = #tpu.pipeline_mode<synchronous>, transform_indices = @transform_2, window_bounds = array<i64: 1, 128>}, {pipeline_mode = #tpu.pipeline_mode<synchronous>, transform_indices = @transform_3, window_bounds = array<i64: 128, 32>}, {pipeline_mode = #tpu.pipeline_mode<synchronous>, transform_indices = @transform_4, window_bounds = array<i64: 1, 32>}, {transform_indices = @transform_5, window_bounds = array<i64: 8, 32>}]} {
    %c0 = arith.constant 0 : index
    %c0_0 = arith.constant 0 : index
    %0 = vector.load %arg1[%c0, %c0_0] : memref<8x32xf32, #tpu.memory_space<vmem>>, vector<8x32xf32>
    %c0_1 = arith.constant 0 : index
    %c0_2 = arith.constant 0 : index
    %1 = vector.load %arg2[%c0_1, %c0_2] : memref<32x128xf32, #tpu.memory_space<vmem>>, vector<32x128xf32>
    %cst = arith.constant dense<0.000000e+00> : vector<8x128xf32>
    %2 = tpu.matmul %0, %1, %cst {dimension_numbers = #tpu.dot_dimension_numbers<[1], [0], [0], [1], [0, 0, 1, 1], [], []>} : vector<8x32xf32>, vector<32x128xf32>, vector<8x128xf32> -> vector<8x128xf32>
    %c0_3 = arith.constant 0 : index
    %c0_4 = arith.constant 0 : index
    %3 = vector.load %arg3[%c0_3, %c0_4] : memref<1x128xf32, #tpu.memory_space<vmem>>, vector<1x128xf32>
    %4 = vector.broadcast %3 : vector<1x128xf32> to vector<8x128xf32>
    %5 = arith.addf %2, %4 : vector<8x128xf32>
    %cst_5 = arith.constant 5.000000e-01 : f32
    %6 = vector.broadcast %cst_5 : f32 to vector<8x128xf32>
    %7 = arith.mulf %6, %5 : vector<8x128xf32>
    %cst_6 = arith.constant 0.707106769 : f32
    %8 = vector.broadcast %cst_6 : f32 to vector<8x128xf32>
    %9 = arith.mulf %5, %8 : vector<8x128xf32>
    %10 = math.erf %9 : vector<8x128xf32>
    %cst_7 = arith.constant 1.000000e+00 : f32
    %11 = vector.broadcast %cst_7 : f32 to vector<8x128xf32>
    %12 = arith.addf %11, %10 : vector<8x128xf32>
    %13 = arith.mulf %7, %12 : vector<8x128xf32>
    %c0_8 = arith.constant 0 : index
    %c0_9 = arith.constant 0 : index
    %14 = vector.load %arg4[%c0_8, %c0_9] : memref<128x32xf32, #tpu.memory_space<vmem>>, vector<128x32xf32>
    %cst_10 = arith.constant dense<0.000000e+00> : vector<8x32xf32>
    %15 = tpu.matmul %13, %14, %cst_10 {dimension_numbers = #tpu.dot_dimension_numbers<[1], [0], [0], [1], [0, 0, 1, 1], [], []>} : vector<8x128xf32>, vector<128x32xf32>, vector<8x32xf32> -> vector<8x32xf32>
    %c0_11 = arith.constant 0 : index
    %c0_12 = arith.constant 0 : index
    %16 = vector.load %arg5[%c0_11, %c0_12] : memref<1x32xf32, #tpu.memory_space<vmem>>, vector<1x32xf32>
    %17 = vector.broadcast %16 : vector<1x32xf32> to vector<8x32xf32>
    %18 = arith.addf %15, %17 : vector<8x32xf32>
    %c0_13 = arith.constant 0 : index
    %c0_14 = arith.constant 0 : index
    %19 = vector.load %arg6[%c0_13, %c0_14] : memref<8x32xf32, #tpu.memory_space<vmem>>, vector<8x32xf32>
    tpu.vector_store %arg6[%c0_13, %c0_14], %18 {strides = array<i32>} : memref<8x32xf32, #tpu.memory_space<vmem>>, vector<8x32xf32>,
    return
  }
  func.func @transform_0(%arg0: i32) -> (i32, i32) {
    %c0_i32 = arith.constant 0 : i32
    %c0_i32_0 = arith.constant 0 : i32
    return %arg0, %c0_i32 : i32, i32
  }
  func.func @transform_1(%arg0: i32) -> (i32, i32) {
    %c0_i32 = arith.constant 0 : i32
    %c0_i32_0 = arith.constant 0 : i32
    %c0_i32_1 = arith.constant 0 : i32
    return %c0_i32, %c0_i32_0 : i32, i32
  }
  func.func @transform_2(%arg0: i32) -> (i32, i32) {
    %c0_i32 = arith.constant 0 : i32
    %c0_i32_0 = arith.constant 0 : i32
    %c0_i32_1 = arith.constant 0 : i32
    return %c0_i32, %c0_i32_0 : i32, i32
  }
  func.func @transform_3(%arg0: i32) -> (i32, i32) {
    %c0_i32 = arith.constant 0 : i32
    %c0_i32_0 = arith.constant 0 : i32
    %c0_i32_1 = arith.constant 0 : i32
    return %c0_i32, %c0_i32_0 : i32, i32
  }
  func.func @transform_4(%arg0: i32) -> (i32, i32) {
    %c0_i32 = arith.constant 0 : i32
    %c0_i32_0 = arith.constant 0 : i32
    %c0_i32_1 = arith.constant 0 : i32
    return %c0_i32, %c0_i32_0 : i32, i32
  }
  func.func @transform_5(%arg0: i32) -> (i32, i32) {
    %c0_i32 = arith.constant 0 : i32
    %c0_i32_0 = arith.constant 0 : i32
    return %arg0, %c0_i32 : i32, i32
  }
}

</mosaic_0001>

<llo_original>
// kernel: tpu_custom_call.1
$region0: #{tpu_custom_call.1}
  #allocation0 [shape = 'u32[]', space=smem, size = 0x4, offset = 0x4, fixed_abs, tag = 'smem constant byte address 0x4 - core index']
  #allocation1 [shape = 'u32[72,128]{1,0:T(1,128)}', space=vmem, size = 0x9000, scoped, tag = 'internal scratch']
  %s0 = inlined_call_operand.vmem [shape: f32[16,32], index: 0, kind: input, shape index: {}]
  %s1 = inlined_call_operand.vmem [shape: f32[32,128], index: 1, kind: input, shape index: {}]
  %s2 = inlined_call_operand.vmem [shape: f32[1,128], index: 2, kind: input, shape index: {}]
  %s3 = inlined_call_operand.vmem [shape: f32[128,32], index: 3, kind: input, shape index: {}]
  %s4 = inlined_call_operand.vmem [shape: f32[1,32], index: 4, kind: input, shape index: {}]
  %s5 = inlined_call_operand.hbm [shape: f32[16,32], index: 5, kind: output, shape index: {}]
  %s6 = sld [smem:[#allocation0]]
  $region53: #{tpu_custom_call.1} parent=0
    _
  %s8 = ssub.s32 1, %s6
  %s9 = scalar_select 0, %s8, %s6
  $region1: #{tpu_custom_call.1} parent=0
    #allocation2 [shape = 'u8[8192]{0}', space=vmem, size = 0x2000, scoped, tag = 'output window, operand 0']
    #allocation3 [shape = 's32[2]{0}', space=sflag, size = 0x8, scoped, tag = 'scoped memory for tpu_custom_call.1']
    %10 = vsyncpa [#allocation3], 0
    %s11 = scalar_lea.sflag [#allocation3], 1
    %12 = vsyncpa %s11, 0
    loop: start=0, step=1, limit=4
    $region2: #{tpu_custom_call.1} parent=1 // loop_pre_header
      _
    $region3: #{tpu_custom_call.1} parent=1 // loop_header
      %s14 = sphi 0, %s18
      %p15 = scmp.ge.s32.totalorder %s14, 4
      %s24 = sphi 0, %s26
      %s27 = sphi 0, %s24
      %s28 = sphi 0, %s27
      %s44 = sphi 0, %s28
      %s48 = sphi 0, %s48
      %s50 = sphi 0, %s48
      %s51 = sphi 0, %s50
      %s65 = sphi 0, %s51
      %s69 = sphi 0, %s69
      %s71 = sphi 0, %s69
      %s72 = sphi 0, %s71
      %s86 = sphi 0, %s72
      %s90 = sphi 0, %s90
      %s92 = sphi 0, %s90
      %s93 = sphi 0, %s92
      %s107 = sphi 0, %s93
      %s111 = sphi 0, %s111
      %s113 = sphi 0, %s111
      %s114 = sphi 0, %s113
      %s128 = sphi 0, %s114
      %s134 = sphi 0, %s136
      %s137 = sphi 0, %s134
      %s138 = sphi 0, %s137
      %s154 = sphi 0, %s138
    $region4: #{tpu_custom_call.1} parent=1 // loop_header_branch
      %17 = sbr.rel (%p15) target = $region8
    $region5: #{tpu_custom_call.1} parent=1 // loop_body
      %s19 = ssub.s32 %s14, 1
      %s20 = ssub.s32 %s14, 2
      %s21 = sadd.s32 %s14, 1
      %s22 = ssub.s32 %s14, %s21
      %p23 = scmp.eq.s32.totalorder %s22, 0
      %s25 = sadd.s32 %s24, 1
      %s26 = scalar_select %p23, %s24, %s25
      %p29 = pneg %p23
      %p30 = scmp.eq.s32.totalorder %s14, 1
      %p31 = por %p29, %p30
      %p32 = scmp.ne.s32.totalorder %s24, %s27
      %p33 = scmp.eq.s32.totalorder %s14, 0
      %p34 = por %p32, %p33
      %p35 = scmp.ne.s32.totalorder %s24, %s27
      %p36 = scmp.eq.s32.totalorder %s19, 1
      %p37 = por %p35, %p36
      %p38 = scmp.ne.s32.totalorder %s27, %s28
      %p39 = scmp.eq.s32.totalorder %s19, 0
      %p40 = por %p38, %p39
      %p41 = scmp.ne.s32.totalorder %s27, %s28
      %p42 = scmp.eq.s32.totalorder %s20, 1
      %p43 = por %p41, %p42
      %p45 = scmp.ne.s32.totalorder %s28, %s44
      %p46 = scmp.eq.s32.totalorder %s20, 0
      %p47 = por %p45, %p46
      %s49 = sadd.s32 %s48, 1
      %p52 = scmp.eq.s32.totalorder %s14, 1
      %p53 = scmp.ne.s32.totalorder %s48, %s50
      %p54 = scmp.eq.s32.totalorder %s14, 0
      %p55 = por %p53, %p54
      %p56 = scmp.ne.s32.totalorder %s48, %s50
      %p57 = scmp.eq.s32.totalorder %s19, 1
      %p58 = por %p56, %p57
      %p59 = scmp.ne.s32.totalorder %s50, %s51
      %p60 = scmp.eq.s32.totalorder %s19, 0
      %p61 = por %p59, %p60
      %p62 = scmp.ne.s32.totalorder %s50, %s51
      %p63 = scmp.eq.s32.totalorder %s20, 1
      %p64 = por %p62, %p63
      %p66 = scmp.ne.s32.totalorder %s51, %s65
      %p67 = scmp.eq.s32.totalorder %s20, 0
      %p68 = por %p66, %p67
      %s70 = sadd.s32 %s69, 1
      %p73 = scmp.eq.s32.totalorder %s14, 1
      %p74 = scmp.ne.s32.totalorder %s69, %s71
      %p75 = scmp.eq.s32.totalorder %s14, 0
      %p76 = por %p74, %p75
      %p77 = scmp.ne.s32.totalorder %s69, %s71
      %p78 = scmp.eq.s32.totalorder %s19, 1
      %p79 = por %p77, %p78
      %p80 = scmp.ne.s32.totalorder %s71, %s72
      %p81 = scmp.eq.s32.totalorder %s19, 0
      %p82 = por %p80, %p81
      %p83 = scmp.ne.s32.totalorder %s71, %s72
      %p84 = scmp.eq.s32.totalorder %s20, 1
      %p85 = por %p83, %p84
      %p87 = scmp.ne.s32.totalorder %s72, %s86
      %p88 = scmp.eq.s32.totalorder %s20, 0
      %p89 = por %p87, %p88
      %s91 = sadd.s32 %s90, 1
      %p94 = scmp.eq.s32.totalorder %s14, 1
      %p95 = scmp.ne.s32.totalorder %s90, %s92
      %p96 = scmp.eq.s32.totalorder %s14, 0
      %p97 = por %p95, %p96
      %p98 = scmp.ne.s32.totalorder %s90, %s92
      %p99 = scmp.eq.s32.totalorder %s19, 1
      %p100 = por %p98, %p99
      %p101 = scmp.ne.s32.totalorder %s92, %s93
      %p102 = scmp.eq.s32.totalorder %s19, 0
      %p103 = por %p101, %p102
      %p104 = scmp.ne.s32.totalorder %s92, %s93
      %p105 = scmp.eq.s32.totalorder %s20, 1
      %p106 = por %p104, %p105
      %p108 = scmp.ne.s32.totalorder %s93, %s107
      %p109 = scmp.eq.s32.totalorder %s20, 0
      %p110 = por %p108, %p109
      %s112 = sadd.s32 %s111, 1
      %p115 = scmp.eq.s32.totalorder %s14, 1
      %p116 = scmp.ne.s32.totalorder %s111, %s113
      %p117 = scmp.eq.s32.totalorder %s14, 0
      %p118 = por %p116, %p117
      %p119 = scmp.ne.s32.totalorder %s111, %s113
      %p120 = scmp.eq.s32.totalorder %s19, 1
      %p121 = por %p119, %p120
      %p122 = scmp.ne.s32.totalorder %s113, %s114
      %p123 = scmp.eq.s32.totalorder %s19, 0
      %p124 = por %p122, %p123
      %p125 = scmp.ne.s32.totalorder %s113, %s114
      %p126 = scmp.eq.s32.totalorder %s20, 1
      %p127 = por %p125, %p126
      %p129 = scmp.ne.s32.totalorder %s114, %s128
      %p130 = scmp.eq.s32.totalorder %s20, 0
      %p131 = por %p129, %p130
      %s132 = ssub.s32 %s14, %s21
      %p133 = scmp.eq.s32.totalorder %s132, 0
      %s135 = sadd.s32 %s134, 1
      %s136 = scalar_select %p133, %s134, %s135
      %p139 = pneg %p133
      %p140 = scmp.eq.s32.totalorder %s14, 1
      %p141 = por %p139, %p140
      %p142 = scmp.ne.s32.totalorder %s134, %s137
      %p143 = scmp.eq.s32.totalorder %s14, 0
      %p144 = por %p142, %p143
      %p145 = scmp.ne.s32.totalorder %s134, %s137
      %p146 = scmp.eq.s32.totalorder %s19, 1
      %p147 = por %p145, %p146
      %p148 = scmp.ne.s32.totalorder %s137, %s138
      %p149 = scmp.eq.s32.totalorder %s19, 0
      %p150 = por %p148, %p149
      %p151 = scmp.ne.s32.totalorder %s137, %s138
      %p152 = scmp.eq.s32.totalorder %s20, 1
      %p153 = por %p151, %p152
      %p155 = scmp.ne.s32.totalorder %s138, %s154
      %p156 = scmp.eq.s32.totalorder %s20, 0
      %p157 = por %p155, %p156
      %p158 = scmp.le.s32.totalorder 1, %s14
      %p159 = scmp.lt.s32.totalorder %s14, 3
      %p160 = pnand %p158, %p159
      %p161 = pneg %p160
      // Predicated region
      $region9: #{tpu_custom_call.1} parent=5 // pred_check
        _
      $region10: #{tpu_custom_call.1} parent=5 // pred_check_branch
        %163 = sbr.rel (%p160) target = $region12
      $region11: #{tpu_custom_call.1} parent=5 // pred_region
        %s164 = ssub.s32 %s14, 1
        // Predicated region
        $region13: #{tpu_custom_call.1} parent=11 // pred_check
          %p165 = pneg %p61
        $region14: #{tpu_custom_call.1} parent=11 // pred_check_branch
          %167 = sbr.rel (%p165) target = $region16
        $region15: #{tpu_custom_call.1} parent=11 // pred_region
          _
        $region16: #{tpu_custom_call.1} parent=11 // pred_fallthru
          _
        // Predicated region
        $region17: #{tpu_custom_call.1} parent=11 // pred_check
          %p168 = pneg %p82
        $region18: #{tpu_custom_call.1} parent=11 // pred_check_branch
          %170 = sbr.rel (%p168) target = $region20
        $region19: #{tpu_custom_call.1} parent=11 // pred_region
          _
        $region20: #{tpu_custom_call.1} parent=11 // pred_fallthru
          _
        // Predicated region
        $region21: #{tpu_custom_call.1} parent=11 // pred_check
          %p171 = pneg %p103
        $region22: #{tpu_custom_call.1} parent=11 // pred_check_branch
          %173 = sbr.rel (%p171) target = $region24
        $region23: #{tpu_custom_call.1} parent=11 // pred_region
          _
        $region24: #{tpu_custom_call.1} parent=11 // pred_fallthru
          _
        // Predicated region
        $region25: #{tpu_custom_call.1} parent=11 // pred_check
          %p174 = pneg %p124
        $region26: #{tpu_custom_call.1} parent=11 // pred_check_branch
          %176 = sbr.rel (%p174) target = $region28
        $region27: #{tpu_custom_call.1} parent=11 // pred_region
          _
        $region28: #{tpu_custom_call.1} parent=11 // pred_fallthru
          _
      $region12: #{tpu_custom_call.1} parent=5 // pred_fallthru
        _
      %p177 = scmp.lt.s32.totalorder %s14, 2
      // Predicated region
      $region29: #{tpu_custom_call.1} parent=5 // pred_check
        %p178 = pneg %p177
      $region30: #{tpu_custom_call.1} parent=5 // pred_check_branch
        %180 = sbr.rel (%p178) target = $region32
      $region31: #{tpu_custom_call.1} parent=5 // pred_region
        // Predicated region
        $region33: #{tpu_custom_call.1} parent=31 // pred_check
          %p181 = pneg %p34
        $region34: #{tpu_custom_call.1} parent=31 // pred_check_branch
          %183 = sbr.rel (%p181) target = $region36
        $region35: #{tpu_custom_call.1} parent=31 // pred_region
          %p184 = scmp.lt.s32.totalorder %s14, 1
          %s185 = scalar_select %p184, %s14, 1
          %s186 = smul.addr %s185, 8
          %s187 = scalar_lea.vmem %s0, %s186
        $region36: #{tpu_custom_call.1} parent=31 // pred_fallthru
          _
      $region32: #{tpu_custom_call.1} parent=5 // pred_fallthru
        _
      %p188 = scmp.le.s32.totalorder 1, %s14
      %p189 = scmp.lt.s32.totalorder %s14, 3
      %p190 = pnand %p188, %p189
      %p191 = pneg %p190
      // Predicated region
      $region37: #{tpu_custom_call.1} parent=5 // pred_check
        _
      $region38: #{tpu_custom_call.1} parent=5 // pred_check_branch
        %193 = sbr.rel (%p190) target = $region40
      $region39: #{tpu_custom_call.1} parent=5 // pred_region
        %s194 = ssub.s32 %s14, 1
        %p195 = scmp.lt.s32.totalorder %s19, 1
        %s196 = scalar_select %p195, %s19, 1
        %s197 = smul.addr %s196, 8
        %s198 = scalar_lea.vmem %s0, %s197
        %p199 = pneg %p40
        %p200 = pneg %p37
        %p201 = pneg %p61
        %p202 = pneg %p58
        %p203 = pneg %p82
        %p204 = pneg %p79
        %p205 = pneg %p103
        %p206 = pneg %p100
        %p207 = pneg %p124
        %p208 = pneg %p121
        %p209 = pneg %p150
        %p210 = pneg %p147
        %s211 = sand.u32 %s137, 1
        %s212 = scalar_lea.sflag [#allocation3], %s211
        %s213 = sand.u32 %s137, 1
        %s214 = smul.addr %s213, 8
        %s215 = scalar_lea.vmem [#allocation2], %s214
        %p216 = scmp.lt.s32.totalorder %s19, 1
        %s217 = scalar_select %p216, %s19, 1
        %s218 = smul.addr %s217, 8
        %s219 = scalar_lea.vmem %s0, %s218
        %v220 = vld [vmem:[%s219] sm:$0xff]
        %v221 = vld [vmem:[%s1] sm:$0xff]
        %v222 = vld [vmem:[%s1 + $0x8] sm:$0xff]
        %v223 = vld [vmem:[%s1 + $0x10] sm:$0xff]
        %v224 = vld [vmem:[%s1 + $0x18] sm:$0xff]
        %v225 = vld [vmem:[%s2] sm:$0x1]
        %v227 = vperm.slane %v225, 0
        %vm229 = vcmask 261120
        %v231 = vsel %vm229, %v220, 0
        %233 = vmatpush.msra.mxu0 0.0
        %234 = vmatpush.msra.mxu0 0.0
        %235 = vmatpush.msra.mxu0 0.0
        %236 = vmatpush.msra.mxu0 0.0
        %237 = vmatpush.msra.mxu0 0.0
        %238 = vmatpush.msra.mxu0 0.0
        %239 = vmatpush.msra.mxu0 0.0
        %240 = vmatpush.msra.mxu0 0.0
        %241 = vmatpush.msra.mxu0 0.0
        %242 = vmatpush.msra.mxu0 0.0
        %243 = vmatpush.msra.mxu0 0.0
        %244 = vmatpush.msra.mxu0 0.0
        %245 = vmatpush.msra.mxu0 %v224
        %246 = vmatpush.msra.mxu0 %v223
        %247 = vmatpush.msra.mxu0 %v222
        %248 = vmatpush.msra.mxu0 %v221
        %249 = vmatmul.f32.gmra.mxu0 %v231
        %v250 = vpop.f32.mrf.mxu0
        %v251 = vadd.f32 %v227, %v250
        %252 = vdwg.mxu0
        %v253 = vmul.f32 %v251, 0.5
        %v254 = vmul.f32 %v251, 0.70710677
        %v255 = vmul.f32 %v254, %v254
        %v256 = vmin.f32 16.0, %v255
        %v257 = vmul.f32 %v256, 2.1237322e-06
        %v258 = vadd.f32 %v257, 0.00028619796
        %v259 = vmul.f32 %v256, %v258
        %v260 = vadd.f32 %v259, 0.0036580483
        %v261 = vmul.f32 %v256, %v260
        %v262 = vadd.f32 %v261, 0.05243302
        %v263 = vmul.f32 %v256, %v262
        %v264 = vadd.f32 %v263, 0.18741608
        %v265 = vmul.f32 %v256, %v264
        %v266 = vadd.f32 %v265, 1.1283791
        %v267 = vmul.f32 %v254, %v266
        %v268 = vmul.f32 %v256, 3.8918573e-05
        %v269 = vadd.f32 %v268, 0.001143296
        %v270 = vmul.f32 %v256, %v269
        %v271 = vadd.f32 %v270, 0.014752088
        %v272 = vmul.f32 %v256, %v271
        %v273 = vadd.f32 %v272, 0.112945676
        %v274 = vmul.f32 %v256, %v273
        %v275 = vadd.f32 %v274, 0.4994258
        %v276 = vmul.f32 %v256, %v275
        %v277 = vadd.f32 %v276, 1.0
        %v278 = vrcp.pop %v277
        %v279 = vmul.f32 %v277, %v278
        %v280 = vsub.f32 1.0, %v279
        %v281 = vmul.f32 %v278, %v280
        %v282 = vadd.f32 %v278, %v281
        %vm283 = vweird.f32 %v277
        %vm284 = vweird.f32 %v278
        %vm285 = vmor %vm283, %vm284
        %v286 = vsel %vm285, %v278, %v282
        %v287 = vand.u32 2147483647, %v277
        %vm288 = vcmp.eq.f32.partialorder %v287, 8.507059e+37
        %v289 = vand.u32 %v277, 2147483648
        %v290 = vor.u32 1.1754944e-38, %v289
        %v291 = vsel %vm288, %v290, %v286
        %v292 = vmul.f32 %v267, %v291
        %v293 = vmin.f32 %v292, 1.0
        %v294 = vmax.f32 %v293, -1.0
        %v295 = vadd.f32 %v294, 1.0
        %v296 = vmul.f32 %v253, %v295
        %v297 = vld [vmem:[%s3] sm:$0xff]
        %v298 = vld [vmem:[%s3 + $0x8] sm:$0xff]
        %v299 = vld [vmem:[%s3 + $0x10] sm:$0xff]
        %v300 = vld [vmem:[%s3 + $0x18] sm:$0xff]
        %v301 = vld [vmem:[%s3 + $0x20] sm:$0xff]
        %v302 = vld [vmem:[%s3 + $0x28] sm:$0xff]
        %v303 = vld [vmem:[%s3 + $0x30] sm:$0xff]
        %v304 = vld [vmem:[%s3 + $0x38] sm:$0xff]
        %v305 = vld [vmem:[%s3 + $0x40] sm:$0xff]
        %v306 = vld [vmem:[%s3 + $0x48] sm:$0xff]
        %v307 = vld [vmem:[%s3 + $0x50] sm:$0xff]
        %v308 = vld [vmem:[%s3 + $0x58] sm:$0xff]
        %v309 = vld [vmem:[%s3 + $0x60] sm:$0xff]
        %v310 = vld [vmem:[%s3 + $0x68] sm:$0xff]
        %v311 = vld [vmem:[%s3 + $0x70] sm:$0xff]
        %v312 = vld [vmem:[%s3 + $0x78] sm:$0xff]
        %v313 = vld [vmem:[%s4] sm:$0x1]
        %v315 = vperm.slane %v313, 0
        %317 = vmatpush.msra.mxu0 %v312
        %318 = vmatpush.msra.mxu0 %v311
        %319 = vmatpush.msra.mxu0 %v310
        %320 = vmatpush.msra.mxu0 %v309
        %321 = vmatpush.msra.mxu0 %v308
        %322 = vmatpush.msra.mxu0 %v307
        %323 = vmatpush.msra.mxu0 %v306
        %324 = vmatpush.msra.mxu0 %v305
        %325 = vmatpush.msra.mxu0 %v304
        %326 = vmatpush.msra.mxu0 %v303
        %327 = vmatpush.msra.mxu0 %v302
        %328 = vmatpush.msra.mxu0 %v301
        %329 = vmatpush.msra.mxu0 %v300
        %330 = vmatpush.msra.mxu0 %v299
        %331 = vmatpush.msra.mxu0 %v298
        %332 = vmatpush.msra.mxu0 %v297
        %333 = vmatmul.f32.gmra.mxu0 %v296
        %v334 = vpop.f32.mrf.mxu0
        %v335 = vadd.f32 %v315, %v334
        %336 = vdwg.mxu0
        %337 = vst.msk [vmem:[%s215] sm:$0xff] %vm229, %v335
        %s338 = sand.u32 %s137, 1
        %s339 = scalar_lea.sflag [#allocation3], %s338
        %s340 = sand.u32 %s137, 1
        %s341 = smul.addr %s340, 8
        %s342 = scalar_lea.vmem [#allocation2], %s341
        // Predicated region
        $region41: #{tpu_custom_call.1} parent=39 // pred_check
          %p343 = pneg %p147
        $region42: #{tpu_custom_call.1} parent=39 // pred_check_branch
          %345 = sbr.rel (%p343) target = $region44
        $region43: #{tpu_custom_call.1} parent=39 // pred_region
          %347 = vsyncadd %s339, 0
          %s348 = smul.addr %s19, 8
          %s349 = scalar_lea.hbm %s5, %s348
          %s351 = sshll.u32 %s342, 4
          %s352 = int_to_ptr.vmem [resolvable:$true] %s351
          %s353 = sshll.u32 %s349, 4
          %s354 = int_to_ptr.hbm [resolvable:$true] %s353
          %356 = dma.vmem_to_hbm [thread:$0]  %s352, 128, %s354, %s339
        $region44: #{tpu_custom_call.1} parent=39 // pred_fallthru
          _
      $region40: #{tpu_custom_call.1} parent=5 // pred_fallthru
        _
      %p357 = scmp.le.s32.totalorder 2, %s14
      // Predicated region
      $region45: #{tpu_custom_call.1} parent=5 // pred_check
        %p358 = pneg %p357
      $region46: #{tpu_custom_call.1} parent=5 // pred_check_branch
        %360 = sbr.rel (%p358) target = $region48
      $region47: #{tpu_custom_call.1} parent=5 // pred_region
        %s361 = ssub.s32 %s14, 2
        // Predicated region
        $region49: #{tpu_custom_call.1} parent=47 // pred_check
          %p362 = pneg %p153
        $region50: #{tpu_custom_call.1} parent=47 // pred_check_branch
          %364 = sbr.rel (%p362) target = $region52
        $region51: #{tpu_custom_call.1} parent=47 // pred_region
          %s365 = sand.u32 %s138, 1
          %s366 = scalar_lea.sflag [#allocation3], %s365
          %s367 = sand.u32 %s138, 1
          %s368 = smul.addr %s367, 8
          %s369 = scalar_lea.vmem [#allocation2], %s368
          %371 = dma.done %s366, 128
        $region52: #{tpu_custom_call.1} parent=47 // pred_fallthru
          _
      $region48: #{tpu_custom_call.1} parent=5 // pred_fallthru
        _
    $region6: #{tpu_custom_call.1} parent=1 // loop_footer
      %s18 = sadd.s32 1, %s14
    $region7: #{tpu_custom_call.1} parent=1 // loop_footer_branch
      %13 = sbr.rel target = $region3
    $region8: #{tpu_custom_call.1} parent=1 // loop_exit
      _
    %372 = vsyncpa [#allocation3], 1
    %s373 = scalar_lea.sflag [#allocation3], 1
    %374 = vsyncpa %s373, 1

</llo_original>
